<compile_context>
chip_gen: v7x
topology: tpu7x:2x2x1
jax: 0.10.0
libtpu: 0.0.40
codegen_flags: <defaults>
</compile_context>

<pallas_src>
import jax
import jax.numpy as jnp
from jax.experimental import pallas as pl
from jax.experimental.pallas import tpu as pltpu

_MiB = 1024 * 1024
_VMEM_BUDGET = 44 * _MiB  # per-TensorCore target (v7x: 64 MiB physical / TC)


def _self_output_kernel(x_ref, wt_ref, b_ref, o_ref):
    # x_ref : (TM, H) streamed token tile (input dtype)
    # wt_ref: (H, H)  resident weight, already [in, out] and compute dtype
    # b_ref : (1, H)  resident f32 bias row
    # o_ref : (TM, H) output tile
    x = x_ref[...].astype(wt_ref.dtype)
    y = jnp.dot(x, wt_ref[...], preferred_element_type=jnp.float32)
    o_ref[...] = (y + b_ref[...]).astype(o_ref.dtype)


def _tile_vmem_bytes(tm, h, in_item, out_item, w_item, w_bufs):
    x_bytes = 2 * tm * h * in_item        # double-buffered x tiles
    o_bytes = 2 * tm * h * out_item       # double-buffered out tiles
    w_bytes = w_bufs * h * h * w_item     # resident weight
    b_bytes = w_bufs * h * 4              # resident f32 bias row
    return x_bytes + o_bytes + w_bytes + b_bytes


def _choose_tile_m(m, h, in_item, out_item, w_item, w_bufs, block_m):
    if m <= 512:
        # Single full-extent block: always layout-legal and trivially fits.
        return m
    for tm in (2048, 1024, 512, 256):
        if tm > block_m or tm > m:
            continue
        if _tile_vmem_bytes(tm, h, in_item, out_item, w_item, w_bufs) <= _VMEM_BUDGET:
            return tm
    return 256


def vit_self_output(hidden_states, weight, bias, *,
                    block_m: int = 2048,
                    compute_dtype=jnp.bfloat16):
    """ViTSelfOutput forward (inference mode; dropout == identity).

    hidden_states: [B, S, H]
    weight:        [H, H]  (torch nn.Linear layout [out, in])
    bias:          [H]
    Returns:       [B, S, H]
    """
    B, S, H = hidden_states.shape
    M = B * S
    x2d = hidden_states.reshape(M, H)

    # Weight prep (ideally hoisted to weight-load time in a real model):
    # torch [out, in] -> [in, out], cast once to the MXU compute dtype.
    wt = weight.T.astype(compute_dtype)
    b2d = bias.reshape(1, H).astype(jnp.float32)

    in_item = jnp.dtype(hidden_states.dtype).itemsize
    out_item = in_item
    w_item = jnp.dtype(compute_dtype).itemsize

    cost = pl.CostEstimate(
        flops=2 * M * H * H,
        transcendentals=0,
        bytes_accessed=(M * H * in_item + H * H * w_item + H * 4
                        + M * H * out_item),
    )

    def build_and_run(single_buffer_invariants: bool):
        w_bufs = 1 if single_buffer_invariants else 2
        tm = _choose_tile_m(M, H, in_item, out_item, w_item, w_bufs, block_m)
        grid = (pl.cdiv(M, tm),)

        needed = _tile_vmem_bytes(tm, H, in_item, out_item, w_item, w_bufs)
        vmem_limit = int(min(max(needed + 4 * _MiB, 32 * _MiB), 48 * _MiB))

        inv_kwargs = {}
        if single_buffer_invariants:
            # Grid-invariant blocks: one buffer is enough, saves VMEM.
            inv_kwargs["pipeline_mode"] = pl.Buffered(1)

        in_specs = [
            pl.BlockSpec((tm, H), lambda i: (i, 0)),                      # streamed x
            pl.BlockSpec((H, H), lambda i: (0, 0), **inv_kwargs),         # resident W^T
            pl.BlockSpec((1, H), lambda i: (0, 0), **inv_kwargs),         # resident bias
        ]
        out_specs = pl.BlockSpec((tm, H), lambda i: (i, 0))

        return pl.pallas_call(
            _self_output_kernel,
            out_shape=jax.ShapeDtypeStruct((M, H), hidden_states.dtype),
            grid=grid,
            in_specs=in_specs,
            out_specs=out_specs,
            compiler_params=pltpu.CompilerParams(
                # Independent output tiles -> parallel axis (megacore on v7x).
                dimension_semantics=("parallel",),
                vmem_limit_bytes=vmem_limit,
            ),
            cost_estimate=cost,
        )(x2d, wt, b2d)

    use_single_buffer = hasattr(pl, "Buffered")
    try:
        out2d = build_and_run(use_single_buffer)
    except Exception:
        if not use_single_buffer:
            raise
        # pipeline_mode / Buffered(1) unsupported on this JAX: fall back to
        # default double-buffering of the invariant blocks.
        out2d = build_and_run(False)

    return out2d.reshape(B, S, H)


if __name__ == "__main__":
    # Config: hidden_size=32, hidden_dropout_prob=0.0 (eval mode anyway)
    B, S, H = 2, 8, 32

    key = jax.random.PRNGKey(0)
    k_x, k_w, k_b = jax.random.split(key, 3)

    hidden_states = jax.random.normal(k_x, (B, S, H), dtype=jnp.float32)

    # Deterministic init matching nn.Linear default: U(-1/sqrt(fan_in), ...)
    bound = 1.0 / (H ** 0.5)
    weight = jax.random.uniform(k_w, (H, H), minval=-bound, maxval=bound,
                                dtype=jnp.float32)   # [out, in]
    bias = jax.random.uniform(k_b, (H,), minval=-bound, maxval=bound,
                              dtype=jnp.float32)

    out = vit_self_output(hidden_states, weight, bias)
    out = jax.block_until_ready(out)
    assert out.shape == (B, S, H)

    # Reference with matching bf16 operand quantization (f32 accumulation).
    xq = hidden_states.astype(jnp.bfloat16).astype(jnp.float32)
    wq = weight.astype(jnp.bfloat16).astype(jnp.float32)
    ref_q = xq @ wq.T + bias
    assert jnp.allclose(out, ref_q, atol=1e-4, rtol=1e-4)

    # Loose sanity check against pure-f32 torch Linear semantics.
    ref_f32 = hidden_states @ weight.T + bias
    assert jnp.allclose(out, ref_f32, atol=5e-2, rtol=5e-2)

    print("KERNEL_OK")
</pallas_src>

<mosaic_0001>
module attributes {stable_mosaic.version = 11 : i64} {
  func.func @_self_output_kernel(%arg0: i32, %arg1: memref<16x32xf32, #tpu.memory_space<vmem>>, %arg2: memref<32x32xbf16, #tpu.memory_space<vmem>>, %arg3: memref<1x32xf32, #tpu.memory_space<vmem>>, %arg4: memref<16x32xf32, #tpu.memory_space<vmem>>) attributes {dimension_semantics = [#tpu.dimension_semantics<parallel>], iteration_bounds = array<i64: 1>, scalar_prefetch = 0 : i64, scratch_operands = 0 : i64, tpu.core_type = #tpu.core_type<tc>, window_params = [{transform_indices = @transform_0, window_bounds = array<i64: 16, 32>}, {pipeline_mode = #tpu.pipeline_mode<synchronous>, transform_indices = @transform_1, window_bounds = array<i64: 32, 32>}, {pipeline_mode = #tpu.pipeline_mode<synchronous>, transform_indices = @transform_2, window_bounds = array<i64: 1, 32>}, {transform_indices = @transform_3, window_bounds = array<i64: 16, 32>}]} {
    %c0 = arith.constant 0 : index
    %c0_0 = arith.constant 0 : index
    %0 = vector.load %arg1[%c0, %c0_0] : memref<16x32xf32, #tpu.memory_space<vmem>>, vector<16x32xf32>
    %1 = arith.truncf %0 : vector<16x32xf32> to vector<16x32xbf16>
    %c0_1 = arith.constant 0 : index
    %c0_2 = arith.constant 0 : index
    %2 = vector.load %arg2[%c0_1, %c0_2] : memref<32x32xbf16, #tpu.memory_space<vmem>>, vector<32x32xbf16>
    %cst = arith.constant dense<0.000000e+00> : vector<16x32xf32>
    %3 = tpu.matmul %1, %2, %cst {dimension_numbers = #tpu.dot_dimension_numbers<[1], [0], [0], [1], [0, 0, 1, 1], [], []>} : vector<16x32xbf16>, vector<32x32xbf16>, vector<16x32xf32> -> vector<16x32xf32>
    %c0_3 = arith.constant 0 : index
    %c0_4 = arith.constant 0 : index
    %4 = vector.load %arg3[%c0_3, %c0_4] : memref<1x32xf32, #tpu.memory_space<vmem>>, vector<1x32xf32>
    %5 = vector.broadcast %4 : vector<1x32xf32> to vector<16x32xf32>
    %6 = arith.addf %3, %5 : vector<16x32xf32>
    %c0_5 = arith.constant 0 : index
    %c0_6 = arith.constant 0 : index
    %7 = vector.load %arg4[%c0_5, %c0_6] : memref<16x32xf32, #tpu.memory_space<vmem>>, vector<16x32xf32>
    tpu.vector_store %arg4[%c0_5, %c0_6], %6 {strides = array<i32>} : memref<16x32xf32, #tpu.memory_space<vmem>>, vector<16x32xf32>,
    return
  }
  func.func @transform_0(%arg0: i32) -> (i32, i32) {
    %c0_i32 = arith.constant 0 : i32
    %c0_i32_0 = arith.constant 0 : i32
    return %arg0, %c0_i32 : i32, i32
  }
  func.func @transform_1(%arg0: i32) -> (i32, i32) {
    %c0_i32 = arith.constant 0 : i32
    %c0_i32_0 = arith.constant 0 : i32
    %c0_i32_1 = arith.constant 0 : i32
    return %c0_i32, %c0_i32_0 : i32, i32
  }
  func.func @transform_2(%arg0: i32) -> (i32, i32) {
    %c0_i32 = arith.constant 0 : i32
    %c0_i32_0 = arith.constant 0 : i32
    %c0_i32_1 = arith.constant 0 : i32
    return %c0_i32, %c0_i32_0 : i32, i32
  }
  func.func @transform_3(%arg0: i32) -> (i32, i32) {
    %c0_i32 = arith.constant 0 : i32
    %c0_i32_0 = arith.constant 0 : i32
    return %arg0, %c0_i32 : i32, i32
  }
}

module attributes {stable_mosaic.version = 11 : i64} {
  func.func @_self_output_kernel(%arg0: i32, %arg1: memref<16x32xf32, #tpu.memory_space<vmem>>, %arg2: memref<32x32xbf16, #tpu.memory_space<vmem>>, %arg3: memref<1x32xf32, #tpu.memory_space<vmem>>, %arg4: memref<16x32xf32, #tpu.memory_space<vmem>>) attributes {dimension_semantics = [#tpu.dimension_semantics<parallel>], iteration_bounds = array<i64: 1>, scalar_prefetch = 0 : i64, scratch_operands = 0 : i64, tpu.core_type = #tpu.core_type<tc>, window_params = [{transform_indices = @transform_0, window_bounds = array<i64: 16, 32>}, {pipeline_mode = #tpu.pipeline_mode<synchronous>, transform_indices = @transform_1, window_bounds = array<i64: 32, 32>}, {pipeline_mode = #tpu.pipeline_mode<synchronous>, transform_indices = @transform_2, window_bounds = array<i64: 1, 32>}, {transform_indices = @transform_3, window_bounds = array<i64: 16, 32>}]} {
    %c0 = arith.constant 0 : index
    %c0_0 = arith.constant 0 : index
    %0 = vector.load %arg1[%c0, %c0_0] : memref<16x32xf32, #tpu.memory_space<vmem>>, vector<16x32xf32>
    %1 = arith.truncf %0 : vector<16x32xf32> to vector<16x32xbf16>
    %c0_1 = arith.constant 0 : index
    %c0_2 = arith.constant 0 : index
    %2 = vector.load %arg2[%c0_1, %c0_2] : memref<32x32xbf16, #tpu.memory_space<vmem>>, vector<32x32xbf16>
    %cst = arith.constant dense<0.000000e+00> : vector<16x32xf32>
    %3 = tpu.matmul %1, %2, %cst {dimension_numbers = #tpu.dot_dimension_numbers<[1], [0], [0], [1], [0, 0, 1, 1], [], []>} : vector<16x32xbf16>, vector<32x32xbf16>, vector<16x32xf32> -> vector<16x32xf32>
    %c0_3 = arith.constant 0 : index
    %c0_4 = arith.constant 0 : index
    %4 = vector.load %arg3[%c0_3, %c0_4] : memref<1x32xf32, #tpu.memory_space<vmem>>, vector<1x32xf32>
    %5 = vector.broadcast %4 : vector<1x32xf32> to vector<16x32xf32>
    %6 = arith.addf %3, %5 : vector<16x32xf32>
    %c0_5 = arith.constant 0 : index
    %c0_6 = arith.constant 0 : index
    %7 = vector.load %arg4[%c0_5, %c0_6] : memref<16x32xf32, #tpu.memory_space<vmem>>, vector<16x32xf32>
    tpu.vector_store %arg4[%c0_5, %c0_6], %6 {strides = array<i32>} : memref<16x32xf32, #tpu.memory_space<vmem>>, vector<16x32xf32>,
    return
  }
  func.func @transform_0(%arg0: i32) -> (i32, i32) {
    %c0_i32 = arith.constant 0 : i32
    %c0_i32_0 = arith.constant 0 : i32
    return %arg0, %c0_i32 : i32, i32
  }
  func.func @transform_1(%arg0: i32) -> (i32, i32) {
    %c0_i32 = arith.constant 0 : i32
    %c0_i32_0 = arith.constant 0 : i32
    %c0_i32_1 = arith.constant 0 : i32
    return %c0_i32, %c0_i32_0 : i32, i32
  }
  func.func @transform_2(%arg0: i32) -> (i32, i32) {
    %c0_i32 = arith.constant 0 : i32
    %c0_i32_0 = arith.constant 0 : i32
    %c0_i32_1 = arith.constant 0 : i32
    return %c0_i32, %c0_i32_0 : i32, i32
  }
  func.func @transform_3(%arg0: i32) -> (i32, i32) {
    %c0_i32 = arith.constant 0 : i32
    %c0_i32_0 = arith.constant 0 : i32
    return %arg0, %c0_i32 : i32, i32
  }
}

</mosaic_0001>

<llo_original>
// kernel: tpu_custom_call.1
$region0: #{tpu_custom_call.1}
  #allocation0 [shape = 'u32[]', space=smem, size = 0x4, offset = 0x4, fixed_abs, tag = 'smem constant byte address 0x4 - core index']
  #allocation1 [shape = 'u32[144,128]{1,0:T(1,128)}', space=vmem, size = 0x12000, scoped, tag = 'internal scratch']
  %s0 = inlined_call_operand.hbm [shape: f32[16,32], index: 0, kind: input, shape index: {}]
  %s1 = inlined_call_operand.hbm [shape: bf16[32,32], index: 1, kind: input, shape index: {}]
  %s2 = inlined_call_operand.vmem [shape: f32[1,32], index: 2, kind: input, shape index: {}]
  %s3 = inlined_call_operand.hbm [shape: f32[16,32], index: 3, kind: output, shape index: {}]
  %s4 = sld [smem:[#allocation0]]
  $region30: #{tpu_custom_call.1} parent=0
    _
  %s6 = ssub.s32 1, %s4
  %s7 = scalar_select 0, %s6, %s4
  $region1: #{tpu_custom_call.1} parent=0
    #allocation2 [shape = 'u8[8192]{0}', space=vmem, size = 0x2000, scoped, tag = 'input window, operand 0, single buffered']
    #allocation3 [shape = 's32[1]{0}', space=sflag, size = 0x4, scoped, tag = 'scoped memory for tpu_custom_call.1']
    #allocation4 [shape = 's32[1]{0}', space=sflag, size = 0x4, scoped, tag = 'scoped memory for tpu_custom_call.1']
    #allocation5 [shape = 'u8[8192]{0}', space=vmem, size = 0x2000, scoped, tag = 'input window, operand 1, single buffered']
    #allocation6 [shape = 's32[1]{0}', space=sflag, size = 0x4, scoped, tag = 'scoped memory for tpu_custom_call.1']
    #allocation7 [shape = 'u8[8192]{0}', space=vmem, size = 0x2000, scoped, tag = 'output window, operand 0, single buffered']
    %8 = vsyncpa [#allocation3], 0
    %9 = vsyncpa [#allocation6], 0
    %10 = vsyncpa [#allocation4], 0
    // Predicated region
    $region2: #{tpu_custom_call.1} parent=1 // pred_check
      _
    $region3: #{tpu_custom_call.1} parent=1 // pred_check_branch
      %12 = sbr.rel (0) target = $region5
    $region4: #{tpu_custom_call.1} parent=1 // pred_region
      %s14 = ssub.s32 256, 256
      %15 = vsyncadd [#allocation3], %s14
      %s16 = sshll.u32 [#allocation2], 4
      %s17 = int_to_ptr.vmem [resolvable:$true] %s16
      %22 = dma.hbm_to_vmem [thread:$0]  %s0, 256, %s17, [#allocation3], 128, 128, 8
    $region5: #{tpu_custom_call.1} parent=1 // pred_fallthru
      _
    // Predicated region
    $region6: #{tpu_custom_call.1} parent=1 // pred_check
      _
    $region7: #{tpu_custom_call.1} parent=1 // pred_check_branch
      %24 = sbr.rel (0) target = $region9
    $region8: #{tpu_custom_call.1} parent=1 // pred_region
      %s26 = ssub.s32 256, 256
      %27 = vsyncadd [#allocation6], %s26
      %s28 = sshll.u32 [#allocation5], 4
      %s29 = int_to_ptr.vmem [resolvable:$true] %s28
      %34 = dma.hbm_to_vmem [thread:$0]  %s1, 256, %s29, [#allocation6], 64, 64, 4
    $region9: #{tpu_custom_call.1} parent=1 // pred_fallthru
      _
    // Predicated region
    $region10: #{tpu_custom_call.1} parent=1 // pred_check
      _
    $region11: #{tpu_custom_call.1} parent=1 // pred_check_branch
      %36 = sbr.rel (0) target = $region13
    $region12: #{tpu_custom_call.1} parent=1 // pred_region
      _
    $region13: #{tpu_custom_call.1} parent=1 // pred_fallthru
      _
    // Predicated region
    $region14: #{tpu_custom_call.1} parent=1 // pred_check
      _
    $region15: #{tpu_custom_call.1} parent=1 // pred_check_branch
      %38 = sbr.rel (0) target = $region17
    $region16: #{tpu_custom_call.1} parent=1 // pred_region
      %39 = dma.done [#allocation3], 256
    $region17: #{tpu_custom_call.1} parent=1 // pred_fallthru
      _
    // Predicated region
    $region18: #{tpu_custom_call.1} parent=1 // pred_check
      _
    $region19: #{tpu_custom_call.1} parent=1 // pred_check_branch
      %41 = sbr.rel (0) target = $region21
    $region20: #{tpu_custom_call.1} parent=1 // pred_region
      %42 = dma.done [#allocation6], 256
    $region21: #{tpu_custom_call.1} parent=1 // pred_fallthru
      _
    %v44 = vld [vmem:[#allocation2] sm:$0xff]
    %v45 = vld [vmem:[#allocation2 + $0x8] sm:$0xff]
    %v46 = vpack.c.bf16 %v45, %v44
    %v47 = vld [vmem:[#allocation5] sm:$0xf]
    %v48 = vld [vmem:[#allocation5 + $0x4] sm:$0xf]
    %v49 = vld [vmem:[#allocation5 + $0x8] sm:$0xf]
    %v50 = vld [vmem:[#allocation5 + $0xc] sm:$0xf]
    %v51 = vld [vmem:[%s2] sm:$0x1]
    %v53 = vlaneseq
    %v54 = vshrl.u32 %v53, 7
    %v55 = vsub.s32 0, %v54
    %v56 = vrot.slane %v51, %v55
    %v62 = vunpack.c.l.b16 %v47
    %v63 = vunpack.c.l.b16 %v48
    %v64 = vunpack.c.l.b16 %v49
    %v65 = vunpack.c.l.b16 %v50
    %v66 = vpack.c.b16 %v63, %v62
    %v67 = vpack.c.b16 %v65, %v64
    %vm70 = vcmask 261120
    %v72 = vsel %vm70, %v46, 0
    %74 = vmatprep.subr.bf16.mxu0 0
    %75 = vmatpush1.bf16.msra.mxu0 %v66
    %76 = vmatprep.subr.bf16.mxu0 0
    %77 = vmatpush1.bf16.msra.mxu0 %v67
    %78 = vmatprep.subr.bf16.mxu0 0
    %79 = vmatpush1.bf16.msra.mxu0 0
    %80 = vmatprep.subr.bf16.mxu0 0
    %81 = vmatpush1.bf16.msra.mxu0 0
    %82 = vmatprep.subr.bf16.mxu0 0
    %83 = vmatpush1.bf16.msra.mxu0 0
    %84 = vmatprep.subr.bf16.mxu0 0
    %85 = vmatpush1.bf16.msra.mxu0 0
    %86 = vmatprep.subr.bf16.mxu0 0
    %87 = vmatpush1.bf16.msra.mxu0 0
    %88 = vmatprep.subr.bf16.mxu0 0
    %89 = vmatpush1.bf16.msra.mxu0 0
    %90 = vmatprep.subr.bf16.mxu0 0
    %91 = vmatpush1.bf16.msra.mxu0 0
    %92 = vmatprep.subr.bf16.mxu0 0
    %93 = vmatpush1.bf16.msra.mxu0 0
    %94 = vmatprep.subr.bf16.mxu0 0
    %95 = vmatpush1.bf16.msra.mxu0 0
    %96 = vmatprep.subr.bf16.mxu0 0
    %97 = vmatpush1.bf16.msra.mxu0 0
    %98 = vmatprep.subr.bf16.mxu0 0
    %99 = vmatpush1.bf16.msra.mxu0 0
    %100 = vmatprep.subr.bf16.mxu0 0
    %101 = vmatpush1.bf16.msra.mxu0 0
    %102 = vmatprep.subr.bf16.mxu0 0
    %103 = vmatpush1.bf16.msra.mxu0 0
    %104 = vmatprep.subr.bf16.mxu0 0
    %105 = vmatpush1.bf16.msra.mxu0 0
    %106 = vmatprep.mubr.bf16.mxu0 0
    %107 = vmatmul.mubr.bf16.gmra.mrb[0].mxu0 %v72
    %v108 = vpop.f32.mrb[0].mxu0
    %v109 = vadd.f32 %v56, %v108
    %v110 = vpop.f32.mrb[0].mxu0
    %v111 = vpop.f32.mrb[0].mxu0
    %v112 = vadd.f32 %v56, %v111
    %v113 = vpop.f32.mrb[0].mxu0
    %114 = vdwg.mxu0
    %115 = vst.msk [vmem:[#allocation7] sm:$0xff] %vm70, %v109
    %116 = vst.msk [vmem:[#allocation7 + $0x8] sm:$0xff] %vm70, %v112
    // Predicated region
    $region22: #{tpu_custom_call.1} parent=1 // pred_check
      _
    $region23: #{tpu_custom_call.1} parent=1 // pred_check_branch
      %118 = sbr.rel (0) target = $region25
    $region24: #{tpu_custom_call.1} parent=1 // pred_region
      %s120 = ssub.s32 256, 256
      %121 = vsyncadd [#allocation4], %s120
      %s122 = sshll.u32 [#allocation7], 4
      %s123 = int_to_ptr.vmem [resolvable:$true] %s122
      %128 = dma.vmem_to_hbm [thread:$0]  %s123, 256, %s3, [#allocation4], 128, 128, 8
    $region25: #{tpu_custom_call.1} parent=1 // pred_fallthru
      _
    // Predicated region
    $region26: #{tpu_custom_call.1} parent=1 // pred_check
      _
    $region27: #{tpu_custom_call.1} parent=1 // pred_check_branch
      %130 = sbr.rel (0) target = $region29
    $region28: #{tpu_custom_call.1} parent=1 // pred_region
      %131 = dma.done [#allocation4], 256
    $region29: #{tpu_custom_call.1} parent=1 // pred_fallthru
      _
    %132 = vsyncpa [#allocation3], 1
    %133 = vsyncpa [#allocation6], 1
    %134 = vsyncpa [#allocation4], 1

// kernel: tpu_custom_call.1
$region0: #{tpu_custom_call.1}
  #allocation0 [shape = 'u32[]', space=smem, size = 0x4, offset = 0x4, fixed_abs, tag = 'smem constant byte address 0x4 - core index']
  #allocation1 [shape = 'u32[144,128]{1,0:T(1,128)}', space=vmem, size = 0x12000, scoped, tag = 'internal scratch']
  %s0 = inlined_call_operand.hbm [shape: f32[16,32], index: 0, kind: input, shape index: {}]
  %s1 = inlined_call_operand.hbm [shape: bf16[32,32], index: 1, kind: input, shape index: {}]
  %s2 = inlined_call_operand.vmem [shape: f32[1,32], index: 2, kind: input, shape index: {}]
  %s3 = inlined_call_operand.hbm [shape: f32[16,32], index: 3, kind: output, shape index: {}]
  %s4 = sld [smem:[#allocation0]]
  $region30: #{tpu_custom_call.1} parent=0
    _
  %s6 = ssub.s32 1, %s4
  %s7 = scalar_select 0, %s6, %s4
  $region1: #{tpu_custom_call.1} parent=0
    #allocation2 [shape = 'u8[8192]{0}', space=vmem, size = 0x2000, scoped, tag = 'input window, operand 0, single buffered']
    #allocation3 [shape = 's32[1]{0}', space=sflag, size = 0x4, scoped, tag = 'scoped memory for tpu_custom_call.1']
    #allocation4 [shape = 's32[1]{0}', space=sflag, size = 0x4, scoped, tag = 'scoped memory for tpu_custom_call.1']
    #allocation5 [shape = 'u8[8192]{0}', space=vmem, size = 0x2000, scoped, tag = 'input window, operand 1, single buffered']
    #allocation6 [shape = 's32[1]{0}', space=sflag, size = 0x4, scoped, tag = 'scoped memory for tpu_custom_call.1']
    #allocation7 [shape = 'u8[8192]{0}', space=vmem, size = 0x2000, scoped, tag = 'output window, operand 0, single buffered']
    %8 = vsyncpa [#allocation3], 0
    %9 = vsyncpa [#allocation6], 0
    %10 = vsyncpa [#allocation4], 0
    // Predicated region
    $region2: #{tpu_custom_call.1} parent=1 // pred_check
      _
    $region3: #{tpu_custom_call.1} parent=1 // pred_check_branch
      %12 = sbr.rel (0) target = $region5
    $region4: #{tpu_custom_call.1} parent=1 // pred_region
      %s14 = ssub.s32 256, 256
      %15 = vsyncadd [#allocation3], %s14
      %s16 = sshll.u32 [#allocation2], 4
      %s17 = int_to_ptr.vmem [resolvable:$true] %s16
      %22 = dma.hbm_to_vmem [thread:$0]  %s0, 256, %s17, [#allocation3], 128, 128, 8
    $region5: #{tpu_custom_call.1} parent=1 // pred_fallthru
      _
    // Predicated region
    $region6: #{tpu_custom_call.1} parent=1 // pred_check
      _
    $region7: #{tpu_custom_call.1} parent=1 // pred_check_branch
      %24 = sbr.rel (0) target = $region9
    $region8: #{tpu_custom_call.1} parent=1 // pred_region
      %s26 = ssub.s32 256, 256
      %27 = vsyncadd [#allocation6], %s26
      %s28 = sshll.u32 [#allocation5], 4
      %s29 = int_to_ptr.vmem [resolvable:$true] %s28
      %34 = dma.hbm_to_vmem [thread:$0]  %s1, 256, %s29, [#allocation6], 64, 64, 4
    $region9: #{tpu_custom_call.1} parent=1 // pred_fallthru
      _
    // Predicated region
    $region10: #{tpu_custom_call.1} parent=1 // pred_check
      _
    $region11: #{tpu_custom_call.1} parent=1 // pred_check_branch
      %36 = sbr.rel (0) target = $region13
    $region12: #{tpu_custom_call.1} parent=1 // pred_region
      _
    $region13: #{tpu_custom_call.1} parent=1 // pred_fallthru
      _
    // Predicated region
    $region14: #{tpu_custom_call.1} parent=1 // pred_check
      _
    $region15: #{tpu_custom_call.1} parent=1 // pred_check_branch
      %38 = sbr.rel (0) target = $region17
    $region16: #{tpu_custom_call.1} parent=1 // pred_region
      %39 = dma.done [#allocation3], 256
    $region17: #{tpu_custom_call.1} parent=1 // pred_fallthru
      _
    // Predicated region
    $region18: #{tpu_custom_call.1} parent=1 // pred_check
      _
    $region19: #{tpu_custom_call.1} parent=1 // pred_check_branch
      %41 = sbr.rel (0) target = $region21
    $region20: #{tpu_custom_call.1} parent=1 // pred_region
      %42 = dma.done [#allocation6], 256
    $region21: #{tpu_custom_call.1} parent=1 // pred_fallthru
      _
    %v44 = vld [vmem:[#allocation2] sm:$0xff]
    %v45 = vld [vmem:[#allocation2 + $0x8] sm:$0xff]
    %v46 = vpack.c.bf16 %v45, %v44
    %v47 = vld [vmem:[#allocation5] sm:$0xf]
    %v48 = vld [vmem:[#allocation5 + $0x4] sm:$0xf]
    %v49 = vld [vmem:[#allocation5 + $0x8] sm:$0xf]
    %v50 = vld [vmem:[#allocation5 + $0xc] sm:$0xf]
    %v51 = vld [vmem:[%s2] sm:$0x1]
    %v53 = vlaneseq
    %v54 = vshrl.u32 %v53, 7
    %v55 = vsub.s32 0, %v54
    %v56 = vrot.slane %v51, %v55
    %v62 = vunpack.c.l.b16 %v47
    %v63 = vunpack.c.l.b16 %v48
    %v64 = vunpack.c.l.b16 %v49
    %v65 = vunpack.c.l.b16 %v50
    %v66 = vpack.c.b16 %v63, %v62
    %v67 = vpack.c.b16 %v65, %v64
    %vm70 = vcmask 261120
    %v72 = vsel %vm70, %v46, 0
    %74 = vmatprep.subr.bf16.mxu0 0
    %75 = vmatpush1.bf16.msra.mxu0 %v66
    %76 = vmatprep.subr.bf16.mxu0 0
    %77 = vmatpush1.bf16.msra.mxu0 %v67
    %78 = vmatprep.subr.bf16.mxu0 0
    %79 = vmatpush1.bf16.msra.mxu0 0
    %80 = vmatprep.subr.bf16.mxu0 0
    %81 = vmatpush1.bf16.msra.mxu0 0
    %82 = vmatprep.subr.bf16.mxu0 0
    %83 = vmatpush1.bf16.msra.mxu0 0
    %84 = vmatprep.subr.bf16.mxu0 0
    %85 = vmatpush1.bf16.msra.mxu0 0
    %86 = vmatprep.subr.bf16.mxu0 0
    %87 = vmatpush1.bf16.msra.mxu0 0
    %88 = vmatprep.subr.bf16.mxu0 0
    %89 = vmatpush1.bf16.msra.mxu0 0
    %90 = vmatprep.subr.bf16.mxu0 0
    %91 = vmatpush1.bf16.msra.mxu0 0
    %92 = vmatprep.subr.bf16.mxu0 0
    %93 = vmatpush1.bf16.msra.mxu0 0
    %94 = vmatprep.subr.bf16.mxu0 0
    %95 = vmatpush1.bf16.msra.mxu0 0
    %96 = vmatprep.subr.bf16.mxu0 0
    %97 = vmatpush1.bf16.msra.mxu0 0
    %98 = vmatprep.subr.bf16.mxu0 0
    %99 = vmatpush1.bf16.msra.mxu0 0
    %100 = vmatprep.subr.bf16.mxu0 0
    %101 = vmatpush1.bf16.msra.mxu0 0
    %102 = vmatprep.subr.bf16.mxu0 0
    %103 = vmatpush1.bf16.msra.mxu0 0
    %104 = vmatprep.subr.bf16.mxu0 0
    %105 = vmatpush1.bf16.msra.mxu0 0
    %106 = vmatprep.mubr.bf16.mxu0 0
    %107 = vmatmul.mubr.bf16.gmra.mrb[0].mxu0 %v72
    %v108 = vpop.f32.mrb[0].mxu0
    %v109 = vadd.f32 %v56, %v108
    %v110 = vpop.f32.mrb[0].mxu0
    %v111 = vpop.f32.mrb[0].mxu0
    %v112 = vadd.f32 %v56, %v111
    %v113 = vpop.f32.mrb[0].mxu0
    %114 = vdwg.mxu0
    %115 = vst.msk [vmem:[#allocation7] sm:$0xff] %vm70, %v109
    %116 = vst.msk [vmem:[#allocation7 + $0x8] sm:$0xff] %vm70, %v112
    // Predicated region
    $region22: #{tpu_custom_call.1} parent=1 // pred_check
      _
    $region23: #{tpu_custom_call.1} parent=1 // pred_check_branch
      %118 = sbr.rel (0) target = $region25
    $region24: #{tpu_custom_call.1} parent=1 // pred_region
      %s120 = ssub.s32 256, 256
      %121 = vsyncadd [#allocation4], %s120
      %s122 = sshll.u32 [#allocation7], 4
      %s123 = int_to_ptr.vmem [resolvable:$true] %s122
      %128 = dma.vmem_to_hbm [thread:$0]  %s123, 256, %s3, [#allocation4], 128, 128, 8
    $region25: #{tpu_custom_call.1} parent=1 // pred_fallthru
      _
    // Predicated region
    $region26: #{tpu_custom_call.1} parent=1 // pred_check
      _
    $region27: #{tpu_custom_call.1} parent=1 // pred_check_branch
      %130 = sbr.rel (0) target = $region29
    $region28: #{tpu_custom_call.1} parent=1 // pred_region
      %131 = dma.done [#allocation4], 256
    $region29: #{tpu_custom_call.1} parent=1 // pred_fallthru
      _
    %132 = vsyncpa [#allocation3], 1
    %133 = vsyncpa [#allocation6], 1
    %134 = vsyncpa [#allocation4], 1

</llo_original>
